<compile_context>
chip_gen: v7x
topology: tpu7x:2x2x1
jax: 0.10.0
libtpu: 0.0.40
codegen_flags: <defaults>
</compile_context>

<pallas_src>
import functools

import jax
import jax.numpy as jnp
from jax.experimental import pallas as pl
from jax.experimental.pallas import tpu as pltpu


# ---------------------------------------------------------------------------
# Kernel 1: sum over N (gridded reduction) + gate MLP computed once at the end
# ---------------------------------------------------------------------------
def _se1d_reduce_gate_kernel(x_ref, w1_ref, b1_ref, w2_ref, b2_ref,
                             gate_ref, acc_ref, *, inv_n):
    # x_ref    : (block_n, B*C) block of x viewed as (N, B*C)
    # w1_ref   : (B*C, B*H) block-diagonal compress weight,  b1_ref: (1, B*H)
    # w2_ref   : (B*H, B*C) block-diagonal excitation weight, b2_ref: (1, B*C)
    # gate_ref : (1, B*C) output gate (written only on the last step)
    # acc_ref  : (1, B*C) persistent f32 accumulator (VMEM scratch)
    step = pl.program_id(0)

    @pl.when(step == 0)
    def _init():
        acc_ref[...] = jnp.zeros_like(acc_ref)

    # Accumulate the sum over this block's rows in f32 (per-block upcast only).
    acc_ref[...] += jnp.sum(x_ref[...].astype(jnp.float32), axis=0,
                            keepdims=True)

    @pl.when(step == pl.num_programs(0) - 1)
    def _finalize():
        mean_flat = acc_ref[...] * inv_n                                # (1, B*C)
        h = jnp.dot(mean_flat, w1_ref[...],
                    preferred_element_type=jnp.float32) + b1_ref[...]   # (1, B*H)
        h = jnp.maximum(h, 0.0)
        g = jnp.dot(h, w2_ref[...],
                    preferred_element_type=jnp.float32) + b2_ref[...]   # (1, B*C)
        gate_ref[...] = jax.nn.sigmoid(g)


# ---------------------------------------------------------------------------
# Kernel 2: lane-dense elementwise scale (gridded, double-buffered, parallel)
# ---------------------------------------------------------------------------
def _se1d_scale_kernel(x_ref, g_ref, o_ref):
    x = x_ref[...]                                   # (block_r, L), native dtype
    o_ref[...] = x * g_ref[...].astype(x.dtype)      # gate (1, L) broadcasts rows


# ---------------------------------------------------------------------------
# Wrapper helpers (host-side, trace-time only)
# ---------------------------------------------------------------------------
def _pick_fold(n, bc):
    """Largest useful fold f (dividing n) so the lane dim f*bc is a multiple
    of 128, preferring >= 512 lanes.  Falls back to 1."""
    f = 1
    for cand in range(1, n + 1):
        if n % cand:
            continue
        lanes = cand * bc
        if lanes % 128 == 0:
            f = cand
            if lanes >= 512:
                break
    return f


def _pick_block_rows(rows, target_rows):
    """Largest divisor of `rows` that is <= target_rows and a multiple of 8
    (or equal to `rows`), so blocks tile exactly and satisfy sublane rules."""
    target_rows = max(1, min(int(target_rows), rows))
    for d in range(target_rows, 0, -1):
        if rows % d == 0 and (d % 8 == 0 or d == rows):
            return d
    return rows


# ---------------------------------------------------------------------------
# Public wrapper
# ---------------------------------------------------------------------------
def se1d_pallas(x, w1, b1, w2, b2, *, target_block_bytes=2 * 1024 * 1024):
    """SE1d forward with ndim_index=0.  x: (N, B, C); w1: (H, C), b1: (H,),
    w2: (C, H), b2: (C,) in PyTorch nn.Linear convention."""
    N, B, C = x.shape
    H = w1.shape[0]
    BC = B * C
    itemsize = jnp.dtype(x.dtype).itemsize
    vmem_limit = 32 * 1024 * 1024  # explicit; safe on v5e/v6e/v7x

    # ---------------- pass 1: mean over N + gate ---------------------------
    x_rows = x.reshape(N, BC)
    block_n = _pick_block_rows(N, target_block_bytes // max(1, BC * itemsize))
    grid_red = N // block_n

    # Block-diagonal (kron) form of the two Linear layers so the gate MLP can
    # act directly on the flattened (1, B*C) mean inside the kernel.
    eye_b = jnp.eye(B, dtype=jnp.float32)
    w1_blk = jnp.kron(eye_b, w1.T.astype(jnp.float32))          # (B*C, B*H)
    w2_blk = jnp.kron(eye_b, w2.T.astype(jnp.float32))          # (B*H, B*C)
    b1_flat = jnp.tile(b1.astype(jnp.float32), B).reshape(1, B * H)
    b2_flat = jnp.tile(b2.astype(jnp.float32), B).reshape(1, BC)

    gate = pl.pallas_call(
        functools.partial(_se1d_reduce_gate_kernel, inv_n=1.0 / N),
        out_shape=jax.ShapeDtypeStruct((1, BC), jnp.float32),
        grid=(grid_red,),
        in_specs=[
            pl.BlockSpec((block_n, BC), lambda i: (i, 0)),
            pl.BlockSpec((BC, B * H), lambda i: (0, 0)),
            pl.BlockSpec((1, B * H), lambda i: (0, 0)),
            pl.BlockSpec((B * H, BC), lambda i: (0, 0)),
            pl.BlockSpec((1, BC), lambda i: (0, 0)),
        ],
        out_specs=pl.BlockSpec((1, BC), lambda i: (0, 0)),
        scratch_shapes=[pltpu.VMEM((1, BC), jnp.float32)],
        compiler_params=pltpu.CompilerParams(
            dimension_semantics=("arbitrary",),
            vmem_limit_bytes=vmem_limit),
    )(x_rows, w1_blk, b1_flat, w2_blk, b2_flat)

    # ---------------- pass 2: lane-dense elementwise scale -----------------
    fold = _pick_fold(N, BC)
    L = fold * BC
    R = N // fold
    x_lane = x.reshape(R, L)                   # row r = fold consecutive N-rows
    gate_lane = jnp.tile(gate, (1, fold))      # (1, L) -- tiny, period B*C

    block_r = _pick_block_rows(R, target_block_bytes // max(1, L * itemsize))
    grid_scale = R // block_r

    # TODO(synk): could pass input_output_aliases={0: 0} to reuse x's HBM
    # buffer when the caller no longer needs x (skipped here so the demo can
    # still compare against a pure-JAX reference).
    out = pl.pallas_call(
        _se1d_scale_kernel,
        out_shape=jax.ShapeDtypeStruct((R, L), x.dtype),
        grid=(grid_scale,),
        in_specs=[
            pl.BlockSpec((block_r, L), lambda i: (i, 0)),
            pl.BlockSpec((1, L), lambda i: (0, 0)),
        ],
        out_specs=pl.BlockSpec((block_r, L), lambda i: (i, 0)),
        compiler_params=pltpu.CompilerParams(
            dimension_semantics=("parallel",),
            vmem_limit_bytes=vmem_limit),
    )(x_lane, gate_lane)

    return out.reshape(N, B, C)


if __name__ == "__main__":
    # SE1d(in_chnls=32, ratio=4, ndim_index=0) on a small (N, B, C) input.
    N, B, C = 256, 2, 32
    ratio = 4
    H = C // ratio

    key = jax.random.PRNGKey(0)
    kx, k1, k2, k3, k4 = jax.random.split(key, 5)

    x = jax.random.normal(kx, (N, B, C), dtype=jnp.float32)
    # PyTorch Linear parameter shapes: weight (out, in), bias (out,)
    w1 = 0.1 * jax.random.normal(k1, (H, C), dtype=jnp.float32)   # compress.weight
    b1 = 0.1 * jax.random.normal(k2, (H,), dtype=jnp.float32)     # compress.bias
    w2 = 0.1 * jax.random.normal(k3, (C, H), dtype=jnp.float32)   # excitation.weight
    b2 = 0.1 * jax.random.normal(k4, (C,), dtype=jnp.float32)     # excitation.bias

    # Small block target so the demo exercises multi-step grids
    # (4 reduction steps + 4 parallel scale blocks with lane dim 512).
    out = se1d_pallas(x, w1, b1, w2, b2, target_block_bytes=16 * 1024)
    out = jax.block_until_ready(out)

    # pure-JAX reference
    m_ref = jnp.mean(x, axis=0, keepdims=True)
    h_ref = jax.nn.relu(m_ref @ w1.T + b1)
    g_ref = jax.nn.sigmoid(h_ref @ w2.T + b2)
    ref = x * g_ref
    assert jnp.allclose(out, ref, atol=1e-5, rtol=1e-5), "mismatch vs reference"

    print("KERNEL_OK")
</pallas_src>

<mosaic_0001>
module attributes {stable_mosaic.version = 11 : i64} {
  func.func @_se1d_reduce_gate_kernel(%arg0: i32, %arg1: memref<64x64xf32, #tpu.memory_space<vmem>>, %arg2: memref<64x16xf32, #tpu.memory_space<vmem>>, %arg3: memref<1x16xf32, #tpu.memory_space<vmem>>, %arg4: memref<16x64xf32, #tpu.memory_space<vmem>>, %arg5: memref<1x64xf32, #tpu.memory_space<vmem>>, %arg6: memref<1x64xf32, #tpu.memory_space<vmem>>, %arg7: memref<1x64xf32, #tpu.memory_space<vmem>>) attributes {dimension_semantics = [#tpu.dimension_semantics<arbitrary>], iteration_bounds = array<i64: 4>, scalar_prefetch = 0 : i64, scratch_operands = 1 : i64, tpu.core_type = #tpu.core_type<tc>, window_params = [{transform_indices = @transform_0, window_bounds = array<i64: 64, 64>}, {pipeline_mode = #tpu.pipeline_mode<synchronous>, transform_indices = @transform_1, window_bounds = array<i64: 64, 16>}, {pipeline_mode = #tpu.pipeline_mode<synchronous>, transform_indices = @transform_2, window_bounds = array<i64: 1, 16>}, {pipeline_mode = #tpu.pipeline_mode<synchronous>, transform_indices = @transform_3, window_bounds = array<i64: 16, 64>}, {pipeline_mode = #tpu.pipeline_mode<synchronous>, transform_indices = @transform_4, window_bounds = array<i64: 1, 64>}, {pipeline_mode = #tpu.pipeline_mode<synchronous>, transform_indices = @transform_5, window_bounds = array<i64: 1, 64>}]} {
    %c0_i32 = arith.constant 0 : i32
    %0 = arith.cmpi eq, %arg0, %c0_i32 : i32
    %1 = arith.extui %0 : i1 to i32
    %c0_i32_0 = arith.constant 0 : i32
    %2 = arith.cmpi ne, %1, %c0_i32_0 : i32
    scf.if %2 {
      %cst_7 = arith.constant 0.000000e+00 : f32
      %12 = vector.broadcast %cst_7 : f32 to vector<1x64xf32>
      %c0_8 = arith.constant 0 : index
      %c0_9 = arith.constant 0 : index
      %13 = vector.load %arg7[%c0_8, %c0_9] : memref<1x64xf32, #tpu.memory_space<vmem>>, vector<1x64xf32>
      tpu.vector_store %arg7[%c0_8, %c0_9], %12 {strides = array<i32>} : memref<1x64xf32, #tpu.memory_space<vmem>>, vector<1x64xf32>,
    } else {
    }
    %c0 = arith.constant 0 : index
    %c0_1 = arith.constant 0 : index
    %3 = vector.load %arg7[%c0, %c0_1] : memref<1x64xf32, #tpu.memory_space<vmem>>, vector<1x64xf32>
    %c0_2 = arith.constant 0 : index
    %c0_3 = arith.constant 0 : index
    %4 = vector.load %arg1[%c0_2, %c0_3] : memref<64x64xf32, #tpu.memory_space<vmem>>, vector<64x64xf32>
    %cst = arith.constant dense<0.000000e+00> : vector<64xf32>
    %5 = vector.multi_reduction <add>, %4, %cst [0] : vector<64x64xf32> to vector<64xf32>
    %6 = vector.shape_cast %5 : vector<64xf32> to vector<1x64xf32>
    %7 = arith.addf %3, %6 : vector<1x64xf32>
    %c0_4 = arith.constant 0 : index
    %c0_5 = arith.constant 0 : index
    %8 = vector.load %arg7[%c0_4, %c0_5] : memref<1x64xf32, #tpu.memory_space<vmem>>, vector<1x64xf32>
    tpu.vector_store %arg7[%c0_4, %c0_5], %7 {strides = array<i32>} : memref<1x64xf32, #tpu.memory_space<vmem>>, vector<1x64xf32>,
    %c3_i32 = arith.constant 3 : i32
    %9 = arith.cmpi eq, %arg0, %c3_i32 : i32
    %10 = arith.extui %9 : i1 to i32
    %c0_i32_6 = arith.constant 0 : i32
    %11 = arith.cmpi ne, %10, %c0_i32_6 : i32
    scf.if %11 {
      %c0_7 = arith.constant 0 : index
      %c0_8 = arith.constant 0 : index
      %12 = vector.load %arg7[%c0_7, %c0_8] : memref<1x64xf32, #tpu.memory_space<vmem>>, vector<1x64xf32>
      %cst_9 = arith.constant 3.906250e-03 : f32
      %13 = vector.broadcast %cst_9 : f32 to vector<1x64xf32>
      %14 = arith.mulf %12, %13 : vector<1x64xf32>
      %c0_10 = arith.constant 0 : index
      %c0_11 = arith.constant 0 : index
      %15 = vector.load %arg2[%c0_10, %c0_11] : memref<64x16xf32, #tpu.memory_space<vmem>>, vector<64x16xf32>
      %cst_12 = arith.constant dense<0.000000e+00> : vector<1x16xf32>
      %16 = tpu.matmul %14, %15, %cst_12 {dimension_numbers = #tpu.dot_dimension_numbers<[1], [0], [0], [1], [0, 0, 1, 1], [], []>} : vector<1x64xf32>, vector<64x16xf32>, vector<1x16xf32> -> vector<1x16xf32>
      %c0_13 = arith.constant 0 : index
      %c0_14 = arith.constant 0 : index
      %17 = vector.load %arg3[%c0_13, %c0_14] : memref<1x16xf32, #tpu.memory_space<vmem>>, vector<1x16xf32>
      %18 = arith.addf %16, %17 : vector<1x16xf32>
      %cst_15 = arith.constant 0.000000e+00 : f32
      %19 = vector.broadcast %cst_15 : f32 to vector<1x16xf32>
      %20 = arith.maximumf %18, %19 : vector<1x16xf32>
      %c0_16 = arith.constant 0 : index
      %c0_17 = arith.constant 0 : index
      %21 = vector.load %arg4[%c0_16, %c0_17] : memref<16x64xf32, #tpu.memory_space<vmem>>, vector<16x64xf32>
      %cst_18 = arith.constant dense<0.000000e+00> : vector<1x64xf32>
      %22 = tpu.matmul %20, %21, %cst_18 {dimension_numbers = #tpu.dot_dimension_numbers<[1], [0], [0], [1], [0, 0, 1, 1], [], []>} : vector<1x16xf32>, vector<16x64xf32>, vector<1x64xf32> -> vector<1x64xf32>
      %c0_19 = arith.constant 0 : index
      %c0_20 = arith.constant 0 : index
      %23 = vector.load %arg5[%c0_19, %c0_20] : memref<1x64xf32, #tpu.memory_space<vmem>>, vector<1x64xf32>
      %24 = arith.addf %22, %23 : vector<1x64xf32>
      %25 = arith.negf %24 : vector<1x64xf32>
      %26 = math.exp %25 : vector<1x64xf32>
      %cst_21 = arith.constant 1.000000e+00 : f32
      %27 = vector.broadcast %cst_21 : f32 to vector<1x64xf32>
      %28 = arith.addf %27, %26 : vector<1x64xf32>
      %29 = arith.divf %27, %28 : vector<1x64xf32>
      %c0_22 = arith.constant 0 : index
      %c0_23 = arith.constant 0 : index
      %30 = vector.load %arg6[%c0_22, %c0_23] : memref<1x64xf32, #tpu.memory_space<vmem>>, vector<1x64xf32>
      tpu.vector_store %arg6[%c0_22, %c0_23], %29 {strides = array<i32>} : memref<1x64xf32, #tpu.memory_space<vmem>>, vector<1x64xf32>,
    } else {
    }
    return
  }
  func.func @transform_0(%arg0: i32) -> (i32, i32) {
    %c0_i32 = arith.constant 0 : i32
    %c0_i32_0 = arith.constant 0 : i32
    return %arg0, %c0_i32 : i32, i32
  }
  func.func @transform_1(%arg0: i32) -> (i32, i32) {
    %c0_i32 = arith.constant 0 : i32
    %c0_i32_0 = arith.constant 0 : i32
    %c0_i32_1 = arith.constant 0 : i32
    return %c0_i32, %c0_i32_0 : i32, i32
  }
  func.func @transform_2(%arg0: i32) -> (i32, i32) {
    %c0_i32 = arith.constant 0 : i32
    %c0_i32_0 = arith.constant 0 : i32
    %c0_i32_1 = arith.constant 0 : i32
    return %c0_i32, %c0_i32_0 : i32, i32
  }
  func.func @transform_3(%arg0: i32) -> (i32, i32) {
    %c0_i32 = arith.constant 0 : i32
    %c0_i32_0 = arith.constant 0 : i32
    %c0_i32_1 = arith.constant 0 : i32
    return %c0_i32, %c0_i32_0 : i32, i32
  }
  func.func @transform_4(%arg0: i32) -> (i32, i32) {
    %c0_i32 = arith.constant 0 : i32
    %c0_i32_0 = arith.constant 0 : i32
    %c0_i32_1 = arith.constant 0 : i32
    return %c0_i32, %c0_i32_0 : i32, i32
  }
  func.func @transform_5(%arg0: i32) -> (i32, i32) {
    %c0_i32 = arith.constant 0 : i32
    %c0_i32_0 = arith.constant 0 : i32
    %c0_i32_1 = arith.constant 0 : i32
    return %c0_i32, %c0_i32_0 : i32, i32
  }
}

</mosaic_0001>

<llo_original>
// kernel: tpu_custom_call.1
$region0: #{tpu_custom_call.1}
  #allocation0 [shape = 'u32[]', space=smem, size = 0x4, offset = 0x4, fixed_abs, tag = 'smem constant byte address 0x4 - core index']
  #allocation1 [shape = 'u32[144,128]{1,0:T(1,128)}', space=vmem, size = 0x12000, scoped, tag = 'internal scratch']
  #allocation2 [shape = 'f32[1,64]{1,0:T(1,128)}', space=vmem, size = 0x200, scoped, tag = 'scratch operand']
  %s0 = inlined_call_operand.vmem [shape: f32[256,64], index: 0, kind: input, shape index: {}]
  %s1 = inlined_call_operand.vmem [shape: f32[64,16], index: 1, kind: input, shape index: {}]
  %s2 = inlined_call_operand.vmem [shape: f32[1,16], index: 2, kind: input, shape index: {}]
  %s3 = inlined_call_operand.vmem [shape: f32[16,64], index: 3, kind: input, shape index: {}]
  %s4 = inlined_call_operand.vmem [shape: f32[1,64], index: 4, kind: input, shape index: {}]
  %s5 = inlined_call_operand.hbm [shape: f32[1,64], index: 5, kind: output, shape index: {}]
  %s6 = sld [smem:[#allocation0]]
  $region61: #{tpu_custom_call.1} parent=0
    _
  %s8 = ssub.s32 1, %s6
  %s9 = scalar_select 0, %s8, %s6
  $region1: #{tpu_custom_call.1} parent=0
    #allocation3 [shape = 'u8[512]{0}', space=vmem, size = 0x400, scoped, tag = 'output window, operand 0, single buffered']
    #allocation4 [shape = 's32[2]{0}', space=sflag, size = 0x8, scoped, tag = 'scoped memory for tpu_custom_call.1']
    %10 = vsyncpa [#allocation4], 0
    loop: start=0, step=1, limit=6
    $region2: #{tpu_custom_call.1} parent=1 // loop_pre_header
      _
    $region3: #{tpu_custom_call.1} parent=1 // loop_header
      %s12 = sphi 0, %s16
      %p13 = scmp.ge.s32.totalorder %s12, 6
      %s22 = sphi 0, %s24
      %s25 = sphi 0, %s22
      %s26 = sphi 0, %s25
      %s42 = sphi 0, %s26
      %s46 = sphi 0, %s46
      %s48 = sphi 0, %s46
      %s49 = sphi 0, %s48
      %s63 = sphi 0, %s49
      %s67 = sphi 0, %s67
      %s69 = sphi 0, %s67
      %s70 = sphi 0, %s69
      %s84 = sphi 0, %s70
      %s88 = sphi 0, %s88
      %s90 = sphi 0, %s88
      %s91 = sphi 0, %s90
      %s105 = sphi 0, %s91
      %s109 = sphi 0, %s109
      %s111 = sphi 0, %s109
      %s112 = sphi 0, %s111
      %s126 = sphi 0, %s112
      %s130 = sphi 0, %s130
      %s132 = sphi 0, %s130
      %s133 = sphi 0, %s132
      %s147 = sphi 0, %s133
    $region4: #{tpu_custom_call.1} parent=1 // loop_header_branch
      %15 = sbr.rel (%p13) target = $region8
    $region5: #{tpu_custom_call.1} parent=1 // loop_body
      %s17 = ssub.s32 %s12, 1
      %s18 = ssub.s32 %s12, 2
      %s19 = sadd.s32 %s12, 1
      %s20 = ssub.s32 %s12, %s19
      %p21 = scmp.eq.s32.totalorder %s20, 0
      %s23 = sadd.s32 %s22, 1
      %s24 = scalar_select %p21, %s22, %s23
      %p27 = pneg %p21
      %p28 = scmp.eq.s32.totalorder %s12, 3
      %p29 = por %p27, %p28
      %p30 = scmp.ne.s32.totalorder %s22, %s25
      %p31 = scmp.eq.s32.totalorder %s12, 0
      %p32 = por %p30, %p31
      %p33 = scmp.ne.s32.totalorder %s22, %s25
      %p34 = scmp.eq.s32.totalorder %s17, 3
      %p35 = por %p33, %p34
      %p36 = scmp.ne.s32.totalorder %s25, %s26
      %p37 = scmp.eq.s32.totalorder %s17, 0
      %p38 = por %p36, %p37
      %p39 = scmp.ne.s32.totalorder %s25, %s26
      %p40 = scmp.eq.s32.totalorder %s18, 3
      %p41 = por %p39, %p40
      %p43 = scmp.ne.s32.totalorder %s26, %s42
      %p44 = scmp.eq.s32.totalorder %s18, 0
      %p45 = por %p43, %p44
      %s47 = sadd.s32 %s46, 1
      %p50 = scmp.eq.s32.totalorder %s12, 3
      %p51 = scmp.ne.s32.totalorder %s46, %s48
      %p52 = scmp.eq.s32.totalorder %s12, 0
      %p53 = por %p51, %p52
      %p54 = scmp.ne.s32.totalorder %s46, %s48
      %p55 = scmp.eq.s32.totalorder %s17, 3
      %p56 = por %p54, %p55
      %p57 = scmp.ne.s32.totalorder %s48, %s49
      %p58 = scmp.eq.s32.totalorder %s17, 0
      %p59 = por %p57, %p58
      %p60 = scmp.ne.s32.totalorder %s48, %s49
      %p61 = scmp.eq.s32.totalorder %s18, 3
      %p62 = por %p60, %p61
      %p64 = scmp.ne.s32.totalorder %s49, %s63
      %p65 = scmp.eq.s32.totalorder %s18, 0
      %p66 = por %p64, %p65
      %s68 = sadd.s32 %s67, 1
      %p71 = scmp.eq.s32.totalorder %s12, 3
      %p72 = scmp.ne.s32.totalorder %s67, %s69
      %p73 = scmp.eq.s32.totalorder %s12, 0
      %p74 = por %p72, %p73
      %p75 = scmp.ne.s32.totalorder %s67, %s69
      %p76 = scmp.eq.s32.totalorder %s17, 3
      %p77 = por %p75, %p76
      %p78 = scmp.ne.s32.totalorder %s69, %s70
      %p79 = scmp.eq.s32.totalorder %s17, 0
      %p80 = por %p78, %p79
      %p81 = scmp.ne.s32.totalorder %s69, %s70
      %p82 = scmp.eq.s32.totalorder %s18, 3
      %p83 = por %p81, %p82
      %p85 = scmp.ne.s32.totalorder %s70, %s84
      %p86 = scmp.eq.s32.totalorder %s18, 0
      %p87 = por %p85, %p86
      %s89 = sadd.s32 %s88, 1
      %p92 = scmp.eq.s32.totalorder %s12, 3
      %p93 = scmp.ne.s32.totalorder %s88, %s90
      %p94 = scmp.eq.s32.totalorder %s12, 0
      %p95 = por %p93, %p94
      %p96 = scmp.ne.s32.totalorder %s88, %s90
      %p97 = scmp.eq.s32.totalorder %s17, 3
      %p98 = por %p96, %p97
      %p99 = scmp.ne.s32.totalorder %s90, %s91
      %p100 = scmp.eq.s32.totalorder %s17, 0
      %p101 = por %p99, %p100
      %p102 = scmp.ne.s32.totalorder %s90, %s91
      %p103 = scmp.eq.s32.totalorder %s18, 3
      %p104 = por %p102, %p103
      %p106 = scmp.ne.s32.totalorder %s91, %s105
      %p107 = scmp.eq.s32.totalorder %s18, 0
      %p108 = por %p106, %p107
      %s110 = sadd.s32 %s109, 1
      %p113 = scmp.eq.s32.totalorder %s12, 3
      %p114 = scmp.ne.s32.totalorder %s109, %s111
      %p115 = scmp.eq.s32.totalorder %s12, 0
      %p116 = por %p114, %p115
      %p117 = scmp.ne.s32.totalorder %s109, %s111
      %p118 = scmp.eq.s32.totalorder %s17, 3
      %p119 = por %p117, %p118
      %p120 = scmp.ne.s32.totalorder %s111, %s112
      %p121 = scmp.eq.s32.totalorder %s17, 0
      %p122 = por %p120, %p121
      %p123 = scmp.ne.s32.totalorder %s111, %s112
      %p124 = scmp.eq.s32.totalorder %s18, 3
      %p125 = por %p123, %p124
      %p127 = scmp.ne.s32.totalorder %s112, %s126
      %p128 = scmp.eq.s32.totalorder %s18, 0
      %p129 = por %p127, %p128
      %s131 = sadd.s32 %s130, 1
      %p134 = scmp.eq.s32.totalorder %s12, 3
      %p135 = scmp.ne.s32.totalorder %s130, %s132
      %p136 = scmp.eq.s32.totalorder %s12, 0
      %p137 = por %p135, %p136
      %p138 = scmp.ne.s32.totalorder %s130, %s132
      %p139 = scmp.eq.s32.totalorder %s17, 3
      %p140 = por %p138, %p139
      %p141 = scmp.ne.s32.totalorder %s132, %s133
      %p142 = scmp.eq.s32.totalorder %s17, 0
      %p143 = por %p141, %p142
      %p144 = scmp.ne.s32.totalorder %s132, %s133
      %p145 = scmp.eq.s32.totalorder %s18, 3
      %p146 = por %p144, %p145
      %p148 = scmp.ne.s32.totalorder %s133, %s147
      %p149 = scmp.eq.s32.totalorder %s18, 0
      %p150 = por %p148, %p149
      %p151 = scmp.le.s32.totalorder 1, %s12
      %p152 = scmp.lt.s32.totalorder %s12, 5
      %p153 = pnand %p151, %p152
      %p154 = pneg %p153
      // Predicated region
      $region9: #{tpu_custom_call.1} parent=5 // pred_check
        _
      $region10: #{tpu_custom_call.1} parent=5 // pred_check_branch
        %156 = sbr.rel (%p153) target = $region12
      $region11: #{tpu_custom_call.1} parent=5 // pred_region
        %s157 = ssub.s32 %s12, 1
        // Predicated region
        $region13: #{tpu_custom_call.1} parent=11 // pred_check
          %p158 = pneg %p59
        $region14: #{tpu_custom_call.1} parent=11 // pred_check_branch
          %160 = sbr.rel (%p158) target = $region16
        $region15: #{tpu_custom_call.1} parent=11 // pred_region
          _
        $region16: #{tpu_custom_call.1} parent=11 // pred_fallthru
          _
        // Predicated region
        $region17: #{tpu_custom_call.1} parent=11 // pred_check
          %p161 = pneg %p80
        $region18: #{tpu_custom_call.1} parent=11 // pred_check_branch
          %163 = sbr.rel (%p161) target = $region20
        $region19: #{tpu_custom_call.1} parent=11 // pred_region
          _
        $region20: #{tpu_custom_call.1} parent=11 // pred_fallthru
          _
        // Predicated region
        $region21: #{tpu_custom_call.1} parent=11 // pred_check
          %p164 = pneg %p101
        $region22: #{tpu_custom_call.1} parent=11 // pred_check_branch
          %166 = sbr.rel (%p164) target = $region24
        $region23: #{tpu_custom_call.1} parent=11 // pred_region
          _
        $region24: #{tpu_custom_call.1} parent=11 // pred_fallthru
          _
        // Predicated region
        $region25: #{tpu_custom_call.1} parent=11 // pred_check
          %p167 = pneg %p122
        $region26: #{tpu_custom_call.1} parent=11 // pred_check_branch
          %169 = sbr.rel (%p167) target = $region28
        $region27: #{tpu_custom_call.1} parent=11 // pred_region
          _
        $region28: #{tpu_custom_call.1} parent=11 // pred_fallthru
          _
      $region12: #{tpu_custom_call.1} parent=5 // pred_fallthru
        _
      %p170 = scmp.lt.s32.totalorder %s12, 4
      // Predicated region
      $region29: #{tpu_custom_call.1} parent=5 // pred_check
        %p171 = pneg %p170
      $region30: #{tpu_custom_call.1} parent=5 // pred_check_branch
        %173 = sbr.rel (%p171) target = $region32
      $region31: #{tpu_custom_call.1} parent=5 // pred_region
        // Predicated region
        $region33: #{tpu_custom_call.1} parent=31 // pred_check
          %p174 = pneg %p32
        $region34: #{tpu_custom_call.1} parent=31 // pred_check_branch
          %176 = sbr.rel (%p174) target = $region36
        $region35: #{tpu_custom_call.1} parent=31 // pred_region
          %s177 = smul.u32 8, %s12
          %p178 = scmp.lt.s32.totalorder %s177, 31
          %s179 = scalar_select %p178, %s177, 31
          %s180 = smul.addr %s179, 8
          %s181 = scalar_lea.vmem %s0, %s180
          %s182 = smul.u32 8, %s12
        $region36: #{tpu_custom_call.1} parent=31 // pred_fallthru
          _
      $region32: #{tpu_custom_call.1} parent=5 // pred_fallthru
        _
      %p183 = scmp.le.s32.totalorder 1, %s12
      %p184 = scmp.lt.s32.totalorder %s12, 5
      %p185 = pnand %p183, %p184
      %p186 = pneg %p185
      // Predicated region
      $region37: #{tpu_custom_call.1} parent=5 // pred_check
        _
      $region38: #{tpu_custom_call.1} parent=5 // pred_check_branch
        %188 = sbr.rel (%p185) target = $region40
      $region39: #{tpu_custom_call.1} parent=5 // pred_region
        %s189 = ssub.s32 %s12, 1
        %s190 = smul.u32 8, %s17
        %p191 = scmp.lt.s32.totalorder %s190, 31
        %s192 = scalar_select %p191, %s190, 31
        %s193 = smul.addr %s192, 8
        %s194 = scalar_lea.vmem %s0, %s193
        %p195 = pneg %p38
        %p196 = pneg %p35
        %p197 = pneg %p59
        %p198 = pneg %p56
        %p199 = pneg %p80
        %p200 = pneg %p77
        %p201 = pneg %p101
        %p202 = pneg %p98
        %p203 = pneg %p122
        %p204 = pneg %p119
        %p205 = pneg %p143
        %p206 = pneg %p140
        %s207 = smul.u32 8, %s17
        %p208 = scmp.lt.s32.totalorder %s207, 31
        %s209 = scalar_select %p208, %s207, 31
        %s210 = smul.addr %s209, 8
        %s211 = scalar_lea.vmem %s0, %s210
        %s212 = smul.u32 8, %s17
        %p213 = scmp.eq.s32.totalorder %s17, 0
        // Predicated region
        $region41: #{tpu_custom_call.1} parent=39 // pred_check
          %p214 = pneg %p213
        $region42: #{tpu_custom_call.1} parent=39 // pred_check_branch
          %216 = sbr.rel (%p214) target = $region44
        $region43: #{tpu_custom_call.1} parent=39 // pred_region
          %vm217 = vcmask 516096
          %218 = vst.msk [vmem:[#allocation2] sm:$0x1] %vm217, 0.0
        $region44: #{tpu_custom_call.1} parent=39 // pred_fallthru
          _
        %v219 = vld [vmem:[#allocation2] sm:$0x1]
        %v220 = vld [vmem:[%s211] sm:$0xff]
        %v221 = vld [vmem:[%s211 + $0x8] sm:$0xff]
        %v222 = vld [vmem:[%s211 + $0x10] sm:$0xff]
        %v223 = vld [vmem:[%s211 + $0x18] sm:$0xff]
        %v224 = vld [vmem:[%s211 + $0x20] sm:$0xff]
        %v225 = vld [vmem:[%s211 + $0x28] sm:$0xff]
        %v226 = vld [vmem:[%s211 + $0x30] sm:$0xff]
        %v227 = vld [vmem:[%s211 + $0x38] sm:$0xff]
        %vm228 = vcmask 523264
        %v229 = vsel %vm228, %v220, 0.0
        %v230 = vsel %vm228, %v221, 0.0
        %v231 = vadd.f32 %v229, %v230
        %v232 = vsel %vm228, %v222, 0.0
        %v233 = vadd.f32 %v231, %v232
        %v234 = vsel %vm228, %v223, 0.0
        %v235 = vadd.f32 %v233, %v234
        %v236 = vsel %vm228, %v224, 0.0
        %v237 = vadd.f32 %v235, %v236
        %v238 = vsel %vm228, %v225, 0.0
        %v239 = vadd.f32 %v237, %v238
        %v240 = vsel %vm228, %v226, 0.0
        %v241 = vadd.f32 %v239, %v240
        %v242 = vsel %vm228, %v227, 0.0
        %v243 = vadd.f32 %v241, %v242
        %v244 = vrot.slane %v243, 4
        %v245 = vadd.f32 %v243, %v244
        %v246 = vrot.slane %v245, 2
        %v247 = vadd.f32 %v245, %v246
        %v248 = vrot.slane %v247, 1
        %v249 = vadd.f32 %v247, %v248
        %v250 = vadd.f32 %v219, %v249
        %vm251 = vcmask 516096
        %252 = vst.msk [vmem:[#allocation2] sm:$0x1] %vm251, %v250
        %p253 = scmp.eq.s32.totalorder %s17, 3
        // Predicated region
        $region45: #{tpu_custom_call.1} parent=39 // pred_check
          %p254 = pneg %p253
        $region46: #{tpu_custom_call.1} parent=39 // pred_check_branch
          %256 = sbr.rel (%p254) target = $region48
        $region47: #{tpu_custom_call.1} parent=39 // pred_region
          %v257 = vld [vmem:[#allocation2] sm:$0x1]
          %v258 = vmul.f32 %v257, 0.00390625
          %v259 = vld [vmem:[%s1] sm:$0xff]
          %v260 = vld [vmem:[%s1 + $0x8] sm:$0xff]
          %v261 = vld [vmem:[%s1 + $0x10] sm:$0xff]
          %v262 = vld [vmem:[%s1 + $0x18] sm:$0xff]
          %v263 = vld [vmem:[%s1 + $0x20] sm:$0xff]
          %v264 = vld [vmem:[%s1 + $0x28] sm:$0xff]
          %v265 = vld [vmem:[%s1 + $0x30] sm:$0xff]
          %v266 = vld [vmem:[%s1 + $0x38] sm:$0xff]
          %v267 = vld [vmem:[%s2] sm:$0x1]
          %v269 = vsel %vm228, %v258, 0
          %271 = vmatprep.subr.mxu0 0.0
          %272 = vmatpush1.msra.mxu0 %v259
          %273 = vmatprep.subr.mxu0 0.0
          %274 = vmatpush1.msra.mxu0 %v260
          %275 = vmatprep.subr.mxu0 0.0
          %276 = vmatpush1.msra.mxu0 %v261
          %277 = vmatprep.subr.mxu0 0.0
          %278 = vmatpush1.msra.mxu0 %v262
          %279 = vmatprep.subr.mxu0 0.0
          %280 = vmatpush1.msra.mxu0 %v263
          %281 = vmatprep.subr.mxu0 0.0
          %282 = vmatpush1.msra.mxu0 %v264
          %283 = vmatprep.subr.mxu0 0.0
          %284 = vmatpush1.msra.mxu0 %v265
          %285 = vmatprep.subr.mxu0 0.0
          %286 = vmatpush1.msra.mxu0 %v266
          %287 = vmatprep.subr.mxu0 0.0
          %288 = vmatpush1.msra.mxu0 0.0
          %289 = vmatprep.subr.mxu0 0.0
          %290 = vmatpush1.msra.mxu0 0.0
          %291 = vmatprep.subr.mxu0 0.0
          %292 = vmatpush1.msra.mxu0 0.0
          %293 = vmatprep.subr.mxu0 0.0
          %294 = vmatpush1.msra.mxu0 0.0
          %295 = vmatprep.subr.mxu0 0.0
          %296 = vmatpush1.msra.mxu0 0.0
          %297 = vmatprep.subr.mxu0 0.0
          %298 = vmatpush1.msra.mxu0 0.0
          %299 = vmatprep.subr.mxu0 0.0
          %300 = vmatpush1.msra.mxu0 0.0
          %301 = vmatprep.subr.mxu0 0.0
          %302 = vmatpush1.msra.mxu0 0.0
          %303 = vmatprep.subr.mxu0 0.0
          %304 = vmatpush1.msra.mxu0 0.0
          %305 = vmatprep.subr.mxu0 0.0
          %306 = vmatpush1.msra.mxu0 0.0
          %307 = vmatprep.subr.mxu0 0.0
          %308 = vmatpush1.msra.mxu0 0.0
          %309 = vmatprep.subr.mxu0 0.0
          %310 = vmatpush1.msra.mxu0 0.0
          %311 = vmatprep.subr.mxu0 0.0
          %312 = vmatpush1.msra.mxu0 0.0
          %313 = vmatprep.subr.mxu0 0.0
          %314 = vmatpush1.msra.mxu0 0.0
          %315 = vmatprep.subr.mxu0 0.0
          %316 = vmatpush1.msra.mxu0 0.0
          %317 = vmatprep.subr.mxu0 0.0
          %318 = vmatpush1.msra.mxu0 0.0
          %319 = vmatprep.subr.mxu0 0.0
          %320 = vmatpush1.msra.mxu0 0.0
          %321 = vmatprep.subr.mxu0 0.0
          %322 = vmatpush1.msra.mxu0 0.0
          %323 = vmatprep.subr.mxu0 0.0
          %324 = vmatpush1.msra.mxu0 0.0
          %325 = vmatprep.subr.mxu0 0.0
          %326 = vmatpush1.msra.mxu0 0.0
          %327 = vmatprep.subr.mxu0 0.0
          %328 = vmatpush1.msra.mxu0 0.0
          %329 = vmatprep.subr.mxu0 0.0
          %330 = vmatpush1.msra.mxu0 0.0
          %331 = vmatprep.subr.mxu0 0.0
          %332 = vmatpush1.msra.mxu0 0.0
          %333 = vmatprep.subr.mxu0 0.0
          %334 = vmatpush1.msra.mxu0 0.0
          %335 = vmatprep.mubr.f32.mxu0 0.0
          %336 = vmatmul.mubr.f32.gmra.mrb[0].mxu0 %v269
          %v337 = vpop.f32.mrb[0].mxu0
          %v338 = vadd.f32 %v267, %v337
          %v339 = vpop.f32.mrb[0].mxu0
          %340 = vdwg.mxu0
          %v341 = vmax.f32 %v338, 0.0
          %v342 = vld [vmem:[%s3] sm:$0xff]
          %v343 = vld [vmem:[%s3 + $0x8] sm:$0xff]
          %v344 = vld [vmem:[%s4] sm:$0x1]
          %vm345 = vcmask 130048
          %v347 = vsel %vm345, %v341, 0
          %349 = vmatprep.subr.mxu0 0.0
          %350 = vmatpush1.msra.mxu0 %v342
          %351 = vmatprep.subr.mxu0 0.0
          %352 = vmatpush1.msra.mxu0 %v343
          %353 = vmatprep.subr.mxu0 0.0
          %354 = vmatpush1.msra.mxu0 0.0
          %355 = vmatprep.subr.mxu0 0.0
          %356 = vmatpush1.msra.mxu0 0.0
          %357 = vmatprep.subr.mxu0 0.0
          %358 = vmatpush1.msra.mxu0 0.0
          %359 = vmatprep.subr.mxu0 0.0
          %360 = vmatpush1.msra.mxu0 0.0
          %361 = vmatprep.subr.mxu0 0.0
          %362 = vmatpush1.msra.mxu0 0.0
          %363 = vmatprep.subr.mxu0 0.0
          %364 = vmatpush1.msra.mxu0 0.0
          %365 = vmatprep.subr.mxu0 0.0
          %366 = vmatpush1.msra.mxu0 0.0
          %367 = vmatprep.subr.mxu0 0.0
          %368 = vmatpush1.msra.mxu0 0.0
          %369 = vmatprep.subr.mxu0 0.0
          %370 = vmatpush1.msra.mxu0 0.0
          %371 = vmatprep.subr.mxu0 0.0
          %372 = vmatpush1.msra.mxu0 0.0
          %373 = vmatprep.subr.mxu0 0.0
          %374 = vmatpush1.msra.mxu0 0.0
          %375 = vmatprep.subr.mxu0 0.0
          %376 = vmatpush1.msra.mxu0 0.0
          %377 = vmatprep.subr.mxu0 0.0
          %378 = vmatpush1.msra.mxu0 0.0
          %379 = vmatprep.subr.mxu0 0.0
          %380 = vmatpush1.msra.mxu0 0.0
          %381 = vmatprep.subr.mxu0 0.0
          %382 = vmatpush1.msra.mxu0 0.0
          %383 = vmatprep.subr.mxu0 0.0
          %384 = vmatpush1.msra.mxu0 0.0
          %385 = vmatprep.subr.mxu0 0.0
          %386 = vmatpush1.msra.mxu0 0.0
          %387 = vmatprep.subr.mxu0 0.0
          %388 = vmatpush1.msra.mxu0 0.0
          %389 = vmatprep.subr.mxu0 0.0
          %390 = vmatpush1.msra.mxu0 0.0
          %391 = vmatprep.subr.mxu0 0.0
          %392 = vmatpush1.msra.mxu0 0.0
          %393 = vmatprep.subr.mxu0 0.0
          %394 = vmatpush1.msra.mxu0 0.0
          %395 = vmatprep.subr.mxu0 0.0
          %396 = vmatpush1.msra.mxu0 0.0
          %397 = vmatprep.subr.mxu0 0.0
          %398 = vmatpush1.msra.mxu0 0.0
          %399 = vmatprep.subr.mxu0 0.0
          %400 = vmatpush1.msra.mxu0 0.0
          %401 = vmatprep.subr.mxu0 0.0
          %402 = vmatpush1.msra.mxu0 0.0
          %403 = vmatprep.subr.mxu0 0.0
          %404 = vmatpush1.msra.mxu0 0.0
          %405 = vmatprep.subr.mxu0 0.0
          %406 = vmatpush1.msra.mxu0 0.0
          %407 = vmatprep.subr.mxu0 0.0
          %408 = vmatpush1.msra.mxu0 0.0
          %409 = vmatprep.subr.mxu0 0.0
          %410 = vmatpush1.msra.mxu0 0.0
          %411 = vmatprep.subr.mxu0 0.0
          %412 = vmatpush1.msra.mxu0 0.0
          %413 = vmatprep.mubr.f32.mxu0 0.0
          %414 = vmatmul.mubr.f32.gmra.mrb[0].mxu0 %v347
          %v415 = vpop.f32.mrb[0].mxu0
          %v416 = vadd.f32 %v344, %v415
          %v417 = vpop.f32.mrb[0].mxu0
          %418 = vdwg.mxu0
          %v419 = vxor.u32 %v416, 2147483648
          %v420 = vmul.f32 %v419, 1.442695
          %v421 = vpow.pop %v420
          %v422 = vadd.f32 %v421, 1.0
          %v423 = vrcp.pop %v422
          %v424 = vmul.f32 1.0, %v423
          %425 = vst.msk [vmem:[#allocation3] sm:$0x1] %vm251, %v424
        $region48: #{tpu_custom_call.1} parent=39 // pred_fallthru
          _
        // Predicated region
        $region49: #{tpu_custom_call.1} parent=39 // pred_check
          %p426 = pneg %p140
        $region50: #{tpu_custom_call.1} parent=39 // pred_check_branch
          %428 = sbr.rel (%p426) target = $region52
        $region51: #{tpu_custom_call.1} parent=39 // pred_region
          %s430 = ssub.s32 16, 16
          %431 = vsyncadd [#allocation4], %s430
          %s433 = sshll.u32 [#allocation3], 4
          %s434 = int_to_ptr.vmem [resolvable:$true] %s433
          %436 = dma.vmem_to_hbm [thread:$0]  %s434, 16, %s5, [#allocation4]
        $region52: #{tpu_custom_call.1} parent=39 // pred_fallthru
          _
        // Predicated region
        $region53: #{tpu_custom_call.1} parent=39 // pred_check
          %p437 = pneg %p140
        $region54: #{tpu_custom_call.1} parent=39 // pred_check_branch
          %439 = sbr.rel (%p437) target = $region56
        $region55: #{tpu_custom_call.1} parent=39 // pred_region
          %440 = dma.done [#allocation4], 16
        $region56: #{tpu_custom_call.1} parent=39 // pred_fallthru
          _
      $region40: #{tpu_custom_call.1} parent=5 // pred_fallthru
        _
      %p441 = scmp.le.s32.totalorder 2, %s12
      // Predicated region
      $region57: #{tpu_custom_call.1} parent=5 // pred_check
        %p442 = pneg %p441
      $region58: #{tpu_custom_call.1} parent=5 // pred_check_branch
        %444 = sbr.rel (%p442) target = $region60
      $region59: #{tpu_custom_call.1} parent=5 // pred_region
        %s445 = ssub.s32 %s12, 2
      $region60: #{tpu_custom_call.1} parent=5 // pred_fallthru
        _
    $region6: #{tpu_custom_call.1} parent=1 // loop_footer
      %s16 = sadd.s32 1, %s12
    $region7: #{tpu_custom_call.1} parent=1 // loop_footer_branch
      %11 = sbr.rel target = $region3
    $region8: #{tpu_custom_call.1} parent=1 // loop_exit
      _
    %446 = vsyncpa [#allocation4], 1
    %s447 = scalar_lea.sflag [#allocation4], 1
    %448 = vsyncpa %s447, 1

</llo_original>
